<compile_context>
chip_gen: v7x
topology: tpu7x:2x2x1
jax: 0.10.0
libtpu: 0.0.40
codegen_flags: <defaults>
</compile_context>

<pallas_src>
import math
import numpy as np

import jax
import jax.numpy as jnp
from jax.experimental import pallas as pl
from jax.experimental.pallas import tpu as pltpu


def _round_up(x, m):
    return ((x + m - 1) // m) * m


class DefaultBoxGeneratorPallas:
    def __init__(self, aspect_ratios, min_ratio=0.15, max_ratio=0.9,
                 scales=None, steps=None, clip=True):
        if steps is not None and len(aspect_ratios) != len(steps):
            raise ValueError("aspect_ratios and steps should have the same length")
        self.aspect_ratios = aspect_ratios
        self.steps = steps
        self.clip = clip
        num_outputs = len(aspect_ratios)
        if scales is None:
            if num_outputs > 1:
                range_ratio = max_ratio - min_ratio
                self.scales = [min_ratio + range_ratio * k / (num_outputs - 1.0)
                               for k in range(num_outputs)]
                self.scales.append(1.0)
            else:
                self.scales = [min_ratio, max_ratio]
        else:
            self.scales = scales
        self._wh_pairs = self._generate_wh_pairs(num_outputs)
        self._cache = {}  # (grid_sizes, (img_h, img_w), dtype_name) -> boxes

    def _generate_wh_pairs(self, num_outputs):
        pairs = []
        for k in range(num_outputs):
            s_k = self.scales[k]
            s_prime_k = math.sqrt(self.scales[k] * self.scales[k + 1])
            wh = [[s_k, s_k], [s_prime_k, s_prime_k]]
            for ar in self.aspect_ratios[k]:
                sq_ar = math.sqrt(ar)
                wh.extend([[s_k * sq_ar, s_k / sq_ar], [s_k / sq_ar, s_k * sq_ar]])
            pairs.append(np.asarray(wh, dtype=np.float32))
        return pairs

    def num_anchors_per_location(self):
        return [2 + 2 * len(r) for r in self.aspect_ratios]

    # --------------------------------------------------------------------- #
    # Single fused Pallas kernel over all levels.                           #
    # --------------------------------------------------------------------- #
    def _compute_default_boxes(self, grid_sizes, img_h, img_w, out_dtype):
        levels = []
        for k, (H, W) in enumerate(grid_sizes):
            if self.steps is not None:
                x_f = img_w / self.steps[k]
                y_f = img_h / self.steps[k]
            else:
                y_f, x_f = float(H), float(W)
            wh = self._wh_pairs[k]
            if self.clip:
                wh = np.clip(wh, 0.0, 1.0)
            wh = wh.astype(np.float32)
            A = int(wh.shape[0])
            LW = W * 4 * A                       # lane axis: j major, anchor a, coord m minor
            LW_pad = _round_up(LW, 128)          # full-width unmasked vst
            H_pad = _round_up(H, 8)              # no sublane masking

            lane = np.arange(LW)
            j = lane // (4 * A)
            a = (lane % (4 * A)) // 4
            m = lane % 4

            # f32 throughout to stay close to the torch rounding behavior.
            cx_cells = (np.arange(W, dtype=np.float32) + np.float32(0.5)) / np.float32(x_f)
            cx = cx_cells[j]
            w_a = wh[a, 0]
            h_a = wh[a, 1]

            # x columns (m even) are fully determined by the lane index.
            x1 = ((cx - np.float32(0.5) * w_a) * np.float32(img_w)).astype(np.float32)
            x2 = ((cx + np.float32(0.5) * w_a) * np.float32(img_w)).astype(np.float32)
            # y columns (m odd): out_y = cy_col + y_off, with y_off baked per lane.
            y_off = (np.where(m == 1, -np.float32(0.5) * h_a, np.float32(0.5) * h_a)
                     * np.float32(img_h)).astype(np.float32)

            is_y = (m % 2) == 1
            base = np.where(is_y, y_off, np.where(m == 0, x1, x2)).astype(np.float32)
            mask = np.where(is_y, np.float32(1.0), np.float32(0.0)).astype(np.float32)

            consts = np.zeros((2, LW_pad), np.float32)
            consts[0, :LW] = mask
            consts[1, :LW] = base

            cy = ((np.arange(H, dtype=np.float32) + np.float32(0.5)) / np.float32(y_f)
                  * np.float32(img_h)).astype(np.float32)
            cy_col = np.zeros((H_pad, 1), np.float32)
            cy_col[:H, 0] = cy

            levels.append({
                "H": int(H), "W": int(W), "A": A,
                "LW": LW, "LW_pad": LW_pad, "H_pad": H_pad,
                "consts": consts, "cy_col": cy_col,
            })

        n = len(levels)
        out_itemsize = np.dtype(out_dtype).itemsize

        def kernel(*refs):
            # refs = [consts_0, cy_0, consts_1, cy_1, ..., out_0, out_1, ...]
            for k in range(n):
                c_ref = refs[2 * k]        # (2, LW_pad) : row 0 = mask, row 1 = base
                cy_ref = refs[2 * k + 1]   # (H_pad, 1)
                o_ref = refs[2 * n + k]    # (H_pad, LW_pad)
                c = c_ref[...]
                o_ref[...] = (cy_ref[...] * c[0:1, :] + c[1:2, :]).astype(o_ref.dtype)

        inputs, in_specs, out_shapes, out_specs = [], [], [], []
        vmem_bytes = 0
        for lv in levels:
            H_pad, LW_pad = lv["H_pad"], lv["LW_pad"]
            inputs += [jnp.asarray(lv["consts"]), jnp.asarray(lv["cy_col"])]
            in_specs += [pl.BlockSpec((2, LW_pad), lambda i: (0, 0)),
                         pl.BlockSpec((H_pad, 1), lambda i: (0, 0))]
            out_shapes.append(jax.ShapeDtypeStruct((H_pad, LW_pad), out_dtype))
            out_specs.append(pl.BlockSpec((H_pad, LW_pad), lambda i: (0, 0)))
            vmem_bytes += 2 * (2 * LW_pad * 4 + H_pad * 4 + H_pad * LW_pad * out_itemsize)

        params = {"dimension_semantics": ("arbitrary",)}
        if vmem_bytes > 30 * (1 << 20):
            # All levels resident with grid=(1,); give the compiler explicit headroom
            # (only triggers for unrealistically large grids; keeps v7x's 64 MiB safe).
            params["vmem_limit_bytes"] = min(int(vmem_bytes) + (8 << 20), 100 << 20)

        outs = pl.pallas_call(
            kernel,
            grid=(1,),
            in_specs=in_specs,
            out_specs=tuple(out_specs),
            out_shape=tuple(out_shapes),
            compiler_params=pltpu.CompilerParams(**params),
        )(*inputs)

        # Slice off lane/sublane padding, then a row-major reshape (cell-major,
        # anchor-minor, [x1,y1,x2,y2]) reproduces the torch row ordering.
        # One-time XLA cost only: the result is memoized.
        flat = [o[:lv["H"], :lv["LW"]].reshape(lv["H"] * lv["W"] * lv["A"], 4)
                for o, lv in zip(outs, levels)]
        return flat[0] if len(flat) == 1 else jnp.concatenate(flat, axis=0)

    # --------------------------------------------------------------------- #
    # Module-equivalent forward                                              #
    # --------------------------------------------------------------------- #
    def __call__(self, images, image_sizes, feature_maps):
        grid_sizes = tuple(tuple(int(s) for s in fm.shape[-2:]) for fm in feature_maps)
        img_h, img_w = int(images.shape[-2]), int(images.shape[-1])
        dtype = np.dtype(feature_maps[0].dtype)

        key = (grid_sizes, (img_h, img_w), dtype.name)
        if key not in self._cache:
            self._cache[key] = self._compute_default_boxes(grid_sizes, img_h, img_w, dtype)
        boxes = self._cache[key]

        # One (identical, immutable) default-box tensor per image in the batch,
        # matching the torch reference semantics.
        return [boxes for _ in image_sizes]


# --------------------------------------------------------------------------- #
# Pure-numpy reference (mirrors the torch code) for a correctness check.       #
# --------------------------------------------------------------------------- #
def _reference_forward(gen, images, image_sizes, feature_maps):
    grid_sizes = [tuple(int(s) for s in fm.shape[-2:]) for fm in feature_maps]
    img_h, img_w = int(images.shape[-2]), int(images.shape[-1])
    boxes = []
    for k, (H, W) in enumerate(grid_sizes):
        if gen.steps is not None:
            x_f = img_w / gen.steps[k]
            y_f = img_h / gen.steps[k]
        else:
            y_f, x_f = H, W
        shifts_x = ((np.arange(W, dtype=np.float32) + 0.5) / np.float32(x_f)).astype(np.float32)
        shifts_y = ((np.arange(H, dtype=np.float32) + 0.5) / np.float32(y_f)).astype(np.float32)
        sy, sx = np.meshgrid(shifts_y, shifts_x, indexing="ij")
        sx = sx.reshape(-1)
        sy = sy.reshape(-1)
        A = gen._wh_pairs[k].shape[0]
        shifts = np.stack([sx, sy] * A, axis=-1).reshape(-1, 2).astype(np.float32)
        wh = np.clip(gen._wh_pairs[k], 0.0, 1.0) if gen.clip else gen._wh_pairs[k]
        whr = np.tile(wh.astype(np.float32), (H * W, 1))
        boxes.append(np.concatenate([shifts, whr], axis=1))
    db = np.concatenate(boxes, axis=0).astype(np.float32)
    xys = np.array([img_w, img_h], dtype=np.float32)
    out = np.concatenate(
        [(db[:, :2] - 0.5 * db[:, 2:]) * xys, (db[:, :2] + 0.5 * db[:, 2:]) * xys],
        axis=-1,
    ).astype(np.float32)
    return [out for _ in image_sizes]


def _check(gen, images, image_sizes, feature_maps):
    out = jax.block_until_ready(gen(images, image_sizes, feature_maps))
    ref = _reference_forward(gen, images, image_sizes, feature_maps)
    for o, r in zip(out, ref):
        assert o.shape == r.shape, (o.shape, r.shape)
        np.testing.assert_allclose(np.asarray(o, dtype=np.float32), r, rtol=1e-5, atol=1e-5)
    return out


if __name__ == "__main__":
    key = jax.random.PRNGKey(0)
    k1, k2, k3, k4, k5, k6 = jax.random.split(key, 6)

    # ---- Test 1: square image / feature maps, default (no steps) path ---- #
    images = jax.random.normal(k1, (2, 3, 16, 16), dtype=jnp.float32)   # NCHW
    image_sizes = [(16, 16), (16, 16)]
    feature_maps = [
        jax.random.normal(k2, (2, 4, 4, 4), dtype=jnp.float32),  # 4x4 grid, A=4
        jax.random.normal(k3, (2, 4, 2, 2), dtype=jnp.float32),  # 2x2 grid, A=6
    ]
    gen = DefaultBoxGeneratorPallas(aspect_ratios=[[2], [2, 3]])
    out = _check(gen, images, image_sizes, feature_maps)

    # Second forward hits the memoization cache (zero kernel launches) and must
    # return identical values.
    out2 = jax.block_until_ready(gen(images, image_sizes, feature_maps))
    np.testing.assert_allclose(np.asarray(out2[0]), np.asarray(out[0]))

    # ---- Test 2: NON-square image + feature maps, steps path (catches any
    #      x/y (width/height) swap in either branch) ---- #
    images_ns = jax.random.normal(k4, (2, 3, 12, 16), dtype=jnp.float32)  # H=12, W=16
    image_sizes_ns = [(12, 16), (12, 16)]
    feature_maps_ns = [
        jax.random.normal(k5, (2, 4, 3, 4), dtype=jnp.float32),  # 3x4 grid
        jax.random.normal(k6, (2, 4, 2, 2), dtype=jnp.float32),  # 2x2 grid
    ]
    gen_ns = DefaultBoxGeneratorPallas(aspect_ratios=[[2], [2, 3]], steps=[4, 8])
    _check(gen_ns, images_ns, image_sizes_ns, feature_maps_ns)

    print("KERNEL_OK")
</pallas_src>

<mosaic_0001>
module attributes {stable_mosaic.version = 11 : i64} {
  func.func @kernel(%arg0: i32, %arg1: memref<2x128xf32, #tpu.memory_space<vmem>>, %arg2: memref<8x1xf32, #tpu.memory_space<vmem>>, %arg3: memref<2x128xf32, #tpu.memory_space<vmem>>, %arg4: memref<8x1xf32, #tpu.memory_space<vmem>>, %arg5: memref<8x128xf32, #tpu.memory_space<vmem>>, %arg6: memref<8x128xf32, #tpu.memory_space<vmem>>) attributes {dimension_semantics = [#tpu.dimension_semantics<arbitrary>], iteration_bounds = array<i64: 1>, scalar_prefetch = 0 : i64, scratch_operands = 0 : i64, tpu.core_type = #tpu.core_type<tc>, window_params = [{pipeline_mode = #tpu.pipeline_mode<synchronous>, transform_indices = @transform_0, window_bounds = array<i64: 2, 128>}, {pipeline_mode = #tpu.pipeline_mode<synchronous>, transform_indices = @transform_1, window_bounds = array<i64: 8, 1>}, {pipeline_mode = #tpu.pipeline_mode<synchronous>, transform_indices = @transform_2, window_bounds = array<i64: 2, 128>}, {pipeline_mode = #tpu.pipeline_mode<synchronous>, transform_indices = @transform_3, window_bounds = array<i64: 8, 1>}, {pipeline_mode = #tpu.pipeline_mode<synchronous>, transform_indices = @transform_4, window_bounds = array<i64: 8, 128>}, {pipeline_mode = #tpu.pipeline_mode<synchronous>, transform_indices = @transform_5, window_bounds = array<i64: 8, 128>}]} {
    %c0 = arith.constant 0 : index
    %c0_0 = arith.constant 0 : index
    %0 = vector.load %arg1[%c0, %c0_0] : memref<2x128xf32, #tpu.memory_space<vmem>>, vector<2x128xf32>
    %c0_1 = arith.constant 0 : index
    %c0_2 = arith.constant 0 : index
    %1 = vector.load %arg2[%c0_1, %c0_2] : memref<8x1xf32, #tpu.memory_space<vmem>>, vector<8x1xf32>
    %2 = vector.extract_strided_slice %0 {offsets = [0, 0], sizes = [1, 128], strides = [1, 1]} : vector<2x128xf32> to vector<1x128xf32>
    %3 = vector.broadcast %1 : vector<8x1xf32> to vector<8x128xf32>
    %4 = vector.broadcast %2 : vector<1x128xf32> to vector<8x128xf32>
    %5 = arith.mulf %3, %4 : vector<8x128xf32>
    %6 = vector.extract_strided_slice %0 {offsets = [1, 0], sizes = [1, 128], strides = [1, 1]} : vector<2x128xf32> to vector<1x128xf32>
    %7 = vector.broadcast %6 : vector<1x128xf32> to vector<8x128xf32>
    %8 = arith.addf %5, %7 : vector<8x128xf32>
    %c0_3 = arith.constant 0 : index
    %c0_4 = arith.constant 0 : index
    %9 = vector.load %arg5[%c0_3, %c0_4] : memref<8x128xf32, #tpu.memory_space<vmem>>, vector<8x128xf32>
    tpu.vector_store %arg5[%c0_3, %c0_4], %8 {strides = array<i32>} : memref<8x128xf32, #tpu.memory_space<vmem>>, vector<8x128xf32>,
    %c0_5 = arith.constant 0 : index
    %c0_6 = arith.constant 0 : index
    %10 = vector.load %arg3[%c0_5, %c0_6] : memref<2x128xf32, #tpu.memory_space<vmem>>, vector<2x128xf32>
    %c0_7 = arith.constant 0 : index
    %c0_8 = arith.constant 0 : index
    %11 = vector.load %arg4[%c0_7, %c0_8] : memref<8x1xf32, #tpu.memory_space<vmem>>, vector<8x1xf32>
    %12 = vector.extract_strided_slice %10 {offsets = [0, 0], sizes = [1, 128], strides = [1, 1]} : vector<2x128xf32> to vector<1x128xf32>
    %13 = vector.broadcast %11 : vector<8x1xf32> to vector<8x128xf32>
    %14 = vector.broadcast %12 : vector<1x128xf32> to vector<8x128xf32>
    %15 = arith.mulf %13, %14 : vector<8x128xf32>
    %16 = vector.extract_strided_slice %10 {offsets = [1, 0], sizes = [1, 128], strides = [1, 1]} : vector<2x128xf32> to vector<1x128xf32>
    %17 = vector.broadcast %16 : vector<1x128xf32> to vector<8x128xf32>
    %18 = arith.addf %15, %17 : vector<8x128xf32>
    %c0_9 = arith.constant 0 : index
    %c0_10 = arith.constant 0 : index
    %19 = vector.load %arg6[%c0_9, %c0_10] : memref<8x128xf32, #tpu.memory_space<vmem>>, vector<8x128xf32>
    tpu.vector_store %arg6[%c0_9, %c0_10], %18 {strides = array<i32>} : memref<8x128xf32, #tpu.memory_space<vmem>>, vector<8x128xf32>,
    return
  }
  func.func @transform_0(%arg0: i32) -> (i32, i32) {
    %c0_i32 = arith.constant 0 : i32
    %c0_i32_0 = arith.constant 0 : i32
    %c0_i32_1 = arith.constant 0 : i32
    return %c0_i32, %c0_i32_0 : i32, i32
  }
  func.func @transform_1(%arg0: i32) -> (i32, i32) {
    %c0_i32 = arith.constant 0 : i32
    %c0_i32_0 = arith.constant 0 : i32
    %c0_i32_1 = arith.constant 0 : i32
    return %c0_i32, %c0_i32_0 : i32, i32
  }
  func.func @transform_2(%arg0: i32) -> (i32, i32) {
    %c0_i32 = arith.constant 0 : i32
    %c0_i32_0 = arith.constant 0 : i32
    %c0_i32_1 = arith.constant 0 : i32
    return %c0_i32, %c0_i32_0 : i32, i32
  }
  func.func @transform_3(%arg0: i32) -> (i32, i32) {
    %c0_i32 = arith.constant 0 : i32
    %c0_i32_0 = arith.constant 0 : i32
    %c0_i32_1 = arith.constant 0 : i32
    return %c0_i32, %c0_i32_0 : i32, i32
  }
  func.func @transform_4(%arg0: i32) -> (i32, i32) {
    %c0_i32 = arith.constant 0 : i32
    %c0_i32_0 = arith.constant 0 : i32
    %c0_i32_1 = arith.constant 0 : i32
    return %c0_i32, %c0_i32_0 : i32, i32
  }
  func.func @transform_5(%arg0: i32) -> (i32, i32) {
    %c0_i32 = arith.constant 0 : i32
    %c0_i32_0 = arith.constant 0 : i32
    %c0_i32_1 = arith.constant 0 : i32
    return %c0_i32, %c0_i32_0 : i32, i32
  }
}

</mosaic_0001>

<llo_original>
// kernel: tpu_custom_call.1
$region0: #{tpu_custom_call.1}
  #allocation0 [shape = 'u32[]', space=smem, size = 0x4, offset = 0x4, fixed_abs, tag = 'smem constant byte address 0x4 - core index']
  #allocation1 [shape = 'u32[144,128]{1,0:T(1,128)}', space=vmem, size = 0x12000, scoped, tag = 'internal scratch']
  %s0 = inlined_call_operand.vmem [shape: f32[2,128], index: 0, kind: input, shape index: {}]
  %s1 = inlined_call_operand.vmem [shape: f32[8,1], index: 1, kind: input, shape index: {}]
  %s2 = inlined_call_operand.vmem [shape: f32[2,128], index: 2, kind: input, shape index: {}]
  %s3 = inlined_call_operand.vmem [shape: f32[8,1], index: 3, kind: input, shape index: {}]
  %s4 = inlined_call_operand.hbm [shape: f32[8,128], index: 4, kind: output, shape index: {0}]
  %s5 = inlined_call_operand.hbm [shape: f32[8,128], index: 5, kind: output, shape index: {1}]
  %6 = xla_tuple %s4, %s5
  %s7 = sld [smem:[#allocation0]]
  $region34: #{tpu_custom_call.1} parent=0
    _
  %s9 = ssub.s32 1, %s7
  %s10 = scalar_select 0, %s9, %s7
  $region1: #{tpu_custom_call.1} parent=0
    #allocation2 [shape = 'u8[4096]{0}', space=vmem, size = 0x1000, scoped, tag = 'output window, operand 0, single buffered']
    #allocation3 [shape = 's32[1]{0}', space=sflag, size = 0x4, scoped, tag = 'scoped memory for tpu_custom_call.1']
    #allocation4 [shape = 'u8[4096]{0}', space=vmem, size = 0x1000, scoped, tag = 'output window, operand 1, single buffered']
    #allocation5 [shape = 's32[1]{0}', space=sflag, size = 0x4, scoped, tag = 'scoped memory for tpu_custom_call.1']
    %11 = vsyncpa [#allocation3], 0
    %12 = vsyncpa [#allocation5], 0
    // Predicated region
    $region2: #{tpu_custom_call.1} parent=1 // pred_check
      _
    $region3: #{tpu_custom_call.1} parent=1 // pred_check_branch
      %14 = sbr.rel (0) target = $region5
    $region4: #{tpu_custom_call.1} parent=1 // pred_region
      _
    $region5: #{tpu_custom_call.1} parent=1 // pred_fallthru
      _
    // Predicated region
    $region6: #{tpu_custom_call.1} parent=1 // pred_check
      _
    $region7: #{tpu_custom_call.1} parent=1 // pred_check_branch
      %16 = sbr.rel (0) target = $region9
    $region8: #{tpu_custom_call.1} parent=1 // pred_region
      _
    $region9: #{tpu_custom_call.1} parent=1 // pred_fallthru
      _
    // Predicated region
    $region10: #{tpu_custom_call.1} parent=1 // pred_check
      _
    $region11: #{tpu_custom_call.1} parent=1 // pred_check_branch
      %18 = sbr.rel (0) target = $region13
    $region12: #{tpu_custom_call.1} parent=1 // pred_region
      _
    $region13: #{tpu_custom_call.1} parent=1 // pred_fallthru
      _
    // Predicated region
    $region14: #{tpu_custom_call.1} parent=1 // pred_check
      _
    $region15: #{tpu_custom_call.1} parent=1 // pred_check_branch
      %20 = sbr.rel (0) target = $region17
    $region16: #{tpu_custom_call.1} parent=1 // pred_region
      _
    $region17: #{tpu_custom_call.1} parent=1 // pred_fallthru
      _
    %v21 = vld [vmem:[%s0] sm:$0x3]
    %v22 = vld [vmem:[%s1] sm:$0xff]
    %24 = vset.pattern.permute.xlu0 0
    %25 = vperm.xlu0 %24, %v22
    %v26 = vpop.permute.xlu0 %25
    %v28 = vlaneseq
    %v29 = vshrl.u32 %v28, 7
    %v30 = vsub.s32 0, %v29
    %v31 = vrot.slane %v21, %v30
    %v32 = vmul.f32 %v26, %v31
    %v33 = vlaneseq
    %v34 = vshrl.u32 %v33, 7
    %v35 = vsub.s32 1, %v34
    %v36 = vrot.slane %v21, %v35
    %v37 = vadd.f32 %v32, %v36
    %38 = vst [vmem:[#allocation2] sm:$0xff] %v37
    %v39 = vld [vmem:[%s2] sm:$0x3]
    %v40 = vld [vmem:[%s3] sm:$0xff]
    %42 = vset.pattern.permute.xlu0 0
    %43 = vperm.xlu0 %42, %v40
    %v44 = vpop.permute.xlu0 %43
    %v46 = vlaneseq
    %v47 = vshrl.u32 %v46, 7
    %v48 = vsub.s32 0, %v47
    %v49 = vrot.slane %v39, %v48
    %v50 = vmul.f32 %v44, %v49
    %v51 = vlaneseq
    %v52 = vshrl.u32 %v51, 7
    %v53 = vsub.s32 1, %v52
    %v54 = vrot.slane %v39, %v53
    %v55 = vadd.f32 %v50, %v54
    %56 = vst [vmem:[#allocation4] sm:$0xff] %v55
    // Predicated region
    $region18: #{tpu_custom_call.1} parent=1 // pred_check
      _
    $region19: #{tpu_custom_call.1} parent=1 // pred_check_branch
      %58 = sbr.rel (0) target = $region21
    $region20: #{tpu_custom_call.1} parent=1 // pred_region
      %s60 = ssub.s32 128, 128
      %61 = vsyncadd [#allocation3], %s60
      %s63 = sshll.u32 [#allocation2], 4
      %s64 = int_to_ptr.vmem [resolvable:$true] %s63
      %66 = dma.vmem_to_hbm [thread:$0]  %s64, 128, %s4, [#allocation3]
    $region21: #{tpu_custom_call.1} parent=1 // pred_fallthru
      _
    // Predicated region
    $region22: #{tpu_custom_call.1} parent=1 // pred_check
      _
    $region23: #{tpu_custom_call.1} parent=1 // pred_check_branch
      %68 = sbr.rel (0) target = $region25
    $region24: #{tpu_custom_call.1} parent=1 // pred_region
      %s70 = ssub.s32 128, 128
      %71 = vsyncadd [#allocation5], %s70
      %s73 = sshll.u32 [#allocation4], 4
      %s74 = int_to_ptr.vmem [resolvable:$true] %s73
      %76 = dma.vmem_to_hbm [thread:$0]  %s74, 128, %s5, [#allocation5]
    $region25: #{tpu_custom_call.1} parent=1 // pred_fallthru
      _
    // Predicated region
    $region26: #{tpu_custom_call.1} parent=1 // pred_check
      _
    $region27: #{tpu_custom_call.1} parent=1 // pred_check_branch
      %78 = sbr.rel (0) target = $region29
    $region28: #{tpu_custom_call.1} parent=1 // pred_region
      %79 = dma.done [#allocation3], 128
    $region29: #{tpu_custom_call.1} parent=1 // pred_fallthru
      _
    // Predicated region
    $region30: #{tpu_custom_call.1} parent=1 // pred_check
      _
    $region31: #{tpu_custom_call.1} parent=1 // pred_check_branch
      %81 = sbr.rel (0) target = $region33
    $region32: #{tpu_custom_call.1} parent=1 // pred_region
      %82 = dma.done [#allocation5], 128
    $region33: #{tpu_custom_call.1} parent=1 // pred_fallthru
      _
    %83 = vsyncpa [#allocation3], 1
    %84 = vsyncpa [#allocation5], 1

</llo_original>
